<compile_context>
chip_gen: v7x
topology: tpu7x:2x2x1
jax: 0.10.0
libtpu: 0.0.40
codegen_flags: <defaults>
</compile_context>

<pallas_src>
import functools

import numpy as np
import jax
import jax.numpy as jnp
from jax.experimental import pallas as pl
from jax.experimental.pallas import tpu as pltpu


# Static network configuration (matches the PyTorch module).
C0, C1, C2 = 3, 8, 4      # channels: input, after enc1, after enc2
KH = KW = 3               # kernel size (both layers)


def _fold_banded_weights(w_oihw, w_in):
    """Fold a (Cout, Cin, KH, KW) conv weight into KH banded matmul matrices.

    Returns m of shape (KH, w_in*Cin, wo*Cout) such that, with the flat layout
    X[h, w*Cin + ci] = x[h, w, ci]:
        Y[oh, ow*Cout + co] = sum_kh (X[oh+kh, :] @ m[kh])[ow*Cout + co]
    equals the valid, stride-1 cross-correlation computed by nn.Conv2d.
    """
    w = np.asarray(w_oihw, np.float32)
    cout, cin, kh_n, kw_n = w.shape
    wo = w_in - kw_n + 1
    m = np.zeros((kh_n, w_in * cin, wo * cout), np.float32)
    for kh in range(kh_n):
        for kw in range(kw_n):
            blk = w[:, :, kh, kw].T                      # (Cin, Cout)
            for ow in range(wo):
                m[kh,
                  (ow + kw) * cin:(ow + kw + 1) * cin,
                  ow * cout:(ow + 1) * cout] = blk
    return m


def init_encoder_params(key):
    """Deterministic params in PyTorch Conv2d layout (Cout, Cin, KH, KW)."""
    k1, k2, k3, k4 = jax.random.split(key, 4)
    w1 = jax.random.normal(k1, (C1, C0, KH, KW), jnp.float32) * 0.1
    b1 = jax.random.normal(k2, (C1,), jnp.float32) * 0.1
    w2 = jax.random.normal(k3, (C2, C1, KH, KW), jnp.float32) * 0.1
    b2 = jax.random.normal(k4, (C2,), jnp.float32) * 0.1
    return {"w1": w1, "b1": b1, "w2": w2, "b2": b2}


def prepare_encoder_params(params, h, w):
    """One-time weight folding + bias tiling (hoisted out of the forward jit)."""
    del h  # only the width enters the banded folding
    wo1 = w - KW + 1
    wo2 = wo1 - KW + 1
    w1f = jnp.asarray(_fold_banded_weights(params["w1"], w))     # (3, W*C0,   Wo1*C1)
    w2f = jnp.asarray(_fold_banded_weights(params["w2"], wo1))   # (3, Wo1*C1, Wo2*C2)
    b1f = jnp.tile(jnp.asarray(params["b1"], jnp.float32), wo1).reshape(1, wo1 * C1)
    b2f = jnp.tile(jnp.asarray(params["b2"], jnp.float32), wo2).reshape(1, wo2 * C2)
    return {"w1f": w1f, "b1f": b1f, "w2f": w2f, "b2f": b2f}


def _encoder_fused_kernel(x_ref, w1_ref, b1_ref, w2_ref, b2_ref, o_ref,
                          *, ho1, n1, ho2, n2):
    """Fused enc1+ReLU -> enc2+ReLU for one batch element.

    x_ref : (1, H, W*C0)          flat-NHWC input
    w1_ref: (KH, W*C0,   Wo1*C1)  banded weights, layer 1
    b1_ref: (1, Wo1*C1)
    w2_ref: (KH, Wo1*C1, Wo2*C2)  banded weights, layer 2
    b2_ref: (1, Wo2*C2)
    o_ref : (1, Ho2, Wo2*C2)      flat-NHWC output
    """
    x = x_ref[0]                                          # (H, W*C0)

    # Layer 1: 3 banded matmuls (one per kernel row) + bias + ReLU.
    acc1 = jnp.zeros((ho1, n1), jnp.float32)
    for kh in range(KH):                                  # static, unrolled
        acc1 = acc1 + jnp.dot(x[kh:kh + ho1, :], w1_ref[kh],
                              preferred_element_type=jnp.float32)
    y1 = jnp.maximum(acc1 + b1_ref[...], 0.0)             # (Ho1, Wo1*C1)

    # Layer 2: intermediate y1 stays on-chip (never touches HBM).
    acc2 = jnp.zeros((ho2, n2), jnp.float32)
    for kh in range(KH):
        acc2 = acc2 + jnp.dot(y1[kh:kh + ho2, :], w2_ref[kh],
                              preferred_element_type=jnp.float32)
    y2 = jnp.maximum(acc2 + b2_ref[...], 0.0)             # (Ho2, Wo2*C2)

    o_ref[0] = y2.astype(o_ref.dtype)


def encoder_pallas(x_flat, w1f, b1f, w2f, b2f):
    """x_flat: (N, H, W*C0) flat-NHWC.  Returns (N, Ho2, Wo2*C2) flat-NHWC."""
    n, h, wc0 = x_flat.shape
    w = wc0 // C0
    ho1, wo1 = h - KH + 1, w - KW + 1
    ho2, wo2 = ho1 - KH + 1, wo1 - KW + 1

    kernel = functools.partial(_encoder_fused_kernel,
                               ho1=ho1, n1=wo1 * C1, ho2=ho2, n2=wo2 * C2)
    return pl.pallas_call(
        kernel,
        out_shape=jax.ShapeDtypeStruct((n, ho2, wo2 * C2), x_flat.dtype),
        grid=(n,),
        in_specs=[
            pl.BlockSpec((1, h, w * C0), lambda i: (i, 0, 0)),
            pl.BlockSpec((KH, w * C0, wo1 * C1), lambda i: (0, 0, 0)),
            pl.BlockSpec((1, wo1 * C1), lambda i: (0, 0)),
            pl.BlockSpec((KH, wo1 * C1, wo2 * C2), lambda i: (0, 0, 0)),
            pl.BlockSpec((1, wo2 * C2), lambda i: (0, 0)),
        ],
        out_specs=pl.BlockSpec((1, ho2, wo2 * C2), lambda i: (i, 0, 0)),
        compiler_params=pltpu.CompilerParams(
            dimension_semantics=("parallel",),
        ),
    )(x_flat, w1f, b1f, w2f, b2f)


@jax.jit
def encoder_forward(x_nchw, folded):
    """Matches Encoder.forward: relu(conv2(relu(conv1(x)))), NCHW in / out."""
    n, c, h, w = x_nchw.shape
    # NCHW -> flat NHWC (H, W*C): one tiny layout op outside the kernel.
    x_flat = jnp.transpose(x_nchw, (0, 2, 3, 1)).reshape(n, h, w * c)
    y = encoder_pallas(x_flat, folded["w1f"], folded["b1f"],
                       folded["w2f"], folded["b2f"])
    ho2 = h - 2 * (KH - 1)
    wo2 = w - 2 * (KW - 1)
    return jnp.transpose(y.reshape(n, ho2, wo2, C2), (0, 3, 1, 2))   # -> NCHW


if __name__ == "__main__":
    key = jax.random.PRNGKey(0)
    k_params, k_x = jax.random.split(key)
    params = init_encoder_params(k_params)

    # Input consistent with Conv2d(in_channels=3): N=2, C=3, H=W=16.
    N, H, W = 2, 16, 16
    x = jax.random.normal(k_x, (N, C0, H, W), jnp.float32)

    folded = prepare_encoder_params(params, H, W)
    out = jax.block_until_ready(encoder_forward(x, folded))
    assert out.shape == (N, C2, H - 4, W - 4), out.shape
    assert bool(jnp.all(out >= 0.0))  # ReLU output

    # Reference check against XLA's conv (PyTorch Conv2d == cross-correlation).
    def ref_forward(xr, p):
        y = jax.lax.conv_general_dilated(
            xr, p["w1"], window_strides=(1, 1), padding="VALID",
            dimension_numbers=("NCHW", "OIHW", "NCHW"))
        y = jax.nn.relu(y + p["b1"][None, :, None, None])
        y = jax.lax.conv_general_dilated(
            y, p["w2"], window_strides=(1, 1), padding="VALID",
            dimension_numbers=("NCHW", "OIHW", "NCHW"))
        return jax.nn.relu(y + p["b2"][None, :, None, None])

    ref = jax.block_until_ready(ref_forward(x, params))
    max_err = float(jnp.max(jnp.abs(out - ref)))
    assert jnp.allclose(out, ref, atol=1e-4, rtol=1e-4), max_err

    print("KERNEL_OK")
</pallas_src>

<mosaic_0001>
module attributes {stable_mosaic.version = 11 : i64} {
  func.func @_encoder_fused_kernel(%arg0: i32, %arg1: memref<1x16x48xf32, #tpu.memory_space<vmem>>, %arg2: memref<3x48x112xf32, #tpu.memory_space<vmem>>, %arg3: memref<1x112xf32, #tpu.memory_space<vmem>>, %arg4: memref<3x112x48xf32, #tpu.memory_space<vmem>>, %arg5: memref<1x48xf32, #tpu.memory_space<vmem>>, %arg6: memref<1x12x48xf32, #tpu.memory_space<vmem>>) attributes {dimension_semantics = [#tpu.dimension_semantics<parallel>], iteration_bounds = array<i64: 2>, scalar_prefetch = 0 : i64, scratch_operands = 0 : i64, tpu.core_type = #tpu.core_type<tc>, window_params = [{transform_indices = @transform_0, window_bounds = array<i64: 1, 16, 48>}, {pipeline_mode = #tpu.pipeline_mode<synchronous>, transform_indices = @transform_1, window_bounds = array<i64: 3, 48, 112>}, {pipeline_mode = #tpu.pipeline_mode<synchronous>, transform_indices = @transform_2, window_bounds = array<i64: 1, 112>}, {pipeline_mode = #tpu.pipeline_mode<synchronous>, transform_indices = @transform_3, window_bounds = array<i64: 3, 112, 48>}, {pipeline_mode = #tpu.pipeline_mode<synchronous>, transform_indices = @transform_4, window_bounds = array<i64: 1, 48>}, {transform_indices = @transform_5, window_bounds = array<i64: 1, 12, 48>}]} {
    %c0 = arith.constant 0 : index
    %c0_0 = arith.constant 0 : index
    %c0_1 = arith.constant 0 : index
    %0 = vector.load %arg1[%c0, %c0_0, %c0_1] : memref<1x16x48xf32, #tpu.memory_space<vmem>>, vector<1x16x48xf32>
    %1 = vector.shape_cast %0 : vector<1x16x48xf32> to vector<16x48xf32>
    %cst = arith.constant 0.000000e+00 : f32
    %2 = vector.broadcast %cst : f32 to vector<14x112xf32>
    %3 = vector.extract_strided_slice %1 {offsets = [0, 0], sizes = [14, 48], strides = [1, 1]} : vector<16x48xf32> to vector<14x48xf32>
    %c0_2 = arith.constant 0 : index
    %c0_3 = arith.constant 0 : index
    %c0_4 = arith.constant 0 : index
    %4 = vector.load %arg2[%c0_2, %c0_3, %c0_4] : memref<3x48x112xf32, #tpu.memory_space<vmem>>, vector<1x48x112xf32>
    %5 = vector.shape_cast %4 : vector<1x48x112xf32> to vector<48x112xf32>
    %cst_5 = arith.constant dense<0.000000e+00> : vector<14x112xf32>
    %6 = tpu.matmul %3, %5, %cst_5 {dimension_numbers = #tpu.dot_dimension_numbers<[1], [0], [0], [1], [0, 0, 1, 1], [], []>} : vector<14x48xf32>, vector<48x112xf32>, vector<14x112xf32> -> vector<14x112xf32>
    %7 = arith.addf %2, %6 : vector<14x112xf32>
    %8 = vector.extract_strided_slice %1 {offsets = [1, 0], sizes = [14, 48], strides = [1, 1]} : vector<16x48xf32> to vector<14x48xf32>
    %c1 = arith.constant 1 : index
    %c0_6 = arith.constant 0 : index
    %c0_7 = arith.constant 0 : index
    %9 = vector.load %arg2[%c1, %c0_6, %c0_7] : memref<3x48x112xf32, #tpu.memory_space<vmem>>, vector<1x48x112xf32>
    %10 = vector.shape_cast %9 : vector<1x48x112xf32> to vector<48x112xf32>
    %cst_8 = arith.constant dense<0.000000e+00> : vector<14x112xf32>
    %11 = tpu.matmul %8, %10, %cst_8 {dimension_numbers = #tpu.dot_dimension_numbers<[1], [0], [0], [1], [0, 0, 1, 1], [], []>} : vector<14x48xf32>, vector<48x112xf32>, vector<14x112xf32> -> vector<14x112xf32>
    %12 = arith.addf %7, %11 : vector<14x112xf32>
    %13 = vector.extract_strided_slice %1 {offsets = [2, 0], sizes = [14, 48], strides = [1, 1]} : vector<16x48xf32> to vector<14x48xf32>
    %c2 = arith.constant 2 : index
    %c0_9 = arith.constant 0 : index
    %c0_10 = arith.constant 0 : index
    %14 = vector.load %arg2[%c2, %c0_9, %c0_10] : memref<3x48x112xf32, #tpu.memory_space<vmem>>, vector<1x48x112xf32>
    %15 = vector.shape_cast %14 : vector<1x48x112xf32> to vector<48x112xf32>
    %cst_11 = arith.constant dense<0.000000e+00> : vector<14x112xf32>
    %16 = tpu.matmul %13, %15, %cst_11 {dimension_numbers = #tpu.dot_dimension_numbers<[1], [0], [0], [1], [0, 0, 1, 1], [], []>} : vector<14x48xf32>, vector<48x112xf32>, vector<14x112xf32> -> vector<14x112xf32>
    %17 = arith.addf %12, %16 : vector<14x112xf32>
    %c0_12 = arith.constant 0 : index
    %c0_13 = arith.constant 0 : index
    %18 = vector.load %arg3[%c0_12, %c0_13] : memref<1x112xf32, #tpu.memory_space<vmem>>, vector<1x112xf32>
    %19 = vector.broadcast %18 : vector<1x112xf32> to vector<14x112xf32>
    %20 = arith.addf %17, %19 : vector<14x112xf32>
    %cst_14 = arith.constant 0.000000e+00 : f32
    %21 = vector.broadcast %cst_14 : f32 to vector<14x112xf32>
    %22 = arith.maximumf %20, %21 : vector<14x112xf32>
    %cst_15 = arith.constant 0.000000e+00 : f32
    %23 = vector.broadcast %cst_15 : f32 to vector<12x48xf32>
    %24 = vector.extract_strided_slice %22 {offsets = [0, 0], sizes = [12, 112], strides = [1, 1]} : vector<14x112xf32> to vector<12x112xf32>
    %c0_16 = arith.constant 0 : index
    %c0_17 = arith.constant 0 : index
    %c0_18 = arith.constant 0 : index
    %25 = vector.load %arg4[%c0_16, %c0_17, %c0_18] : memref<3x112x48xf32, #tpu.memory_space<vmem>>, vector<1x112x48xf32>
    %26 = vector.shape_cast %25 : vector<1x112x48xf32> to vector<112x48xf32>
    %cst_19 = arith.constant dense<0.000000e+00> : vector<12x48xf32>
    %27 = tpu.matmul %24, %26, %cst_19 {dimension_numbers = #tpu.dot_dimension_numbers<[1], [0], [0], [1], [0, 0, 1, 1], [], []>} : vector<12x112xf32>, vector<112x48xf32>, vector<12x48xf32> -> vector<12x48xf32>
    %28 = arith.addf %23, %27 : vector<12x48xf32>
    %29 = vector.extract_strided_slice %22 {offsets = [1, 0], sizes = [12, 112], strides = [1, 1]} : vector<14x112xf32> to vector<12x112xf32>
    %c1_20 = arith.constant 1 : index
    %c0_21 = arith.constant 0 : index
    %c0_22 = arith.constant 0 : index
    %30 = vector.load %arg4[%c1_20, %c0_21, %c0_22] : memref<3x112x48xf32, #tpu.memory_space<vmem>>, vector<1x112x48xf32>
    %31 = vector.shape_cast %30 : vector<1x112x48xf32> to vector<112x48xf32>
    %cst_23 = arith.constant dense<0.000000e+00> : vector<12x48xf32>
    %32 = tpu.matmul %29, %31, %cst_23 {dimension_numbers = #tpu.dot_dimension_numbers<[1], [0], [0], [1], [0, 0, 1, 1], [], []>} : vector<12x112xf32>, vector<112x48xf32>, vector<12x48xf32> -> vector<12x48xf32>
    %33 = arith.addf %28, %32 : vector<12x48xf32>
    %34 = vector.extract_strided_slice %22 {offsets = [2, 0], sizes = [12, 112], strides = [1, 1]} : vector<14x112xf32> to vector<12x112xf32>
    %c2_24 = arith.constant 2 : index
    %c0_25 = arith.constant 0 : index
    %c0_26 = arith.constant 0 : index
    %35 = vector.load %arg4[%c2_24, %c0_25, %c0_26] : memref<3x112x48xf32, #tpu.memory_space<vmem>>, vector<1x112x48xf32>
    %36 = vector.shape_cast %35 : vector<1x112x48xf32> to vector<112x48xf32>
    %cst_27 = arith.constant dense<0.000000e+00> : vector<12x48xf32>
    %37 = tpu.matmul %34, %36, %cst_27 {dimension_numbers = #tpu.dot_dimension_numbers<[1], [0], [0], [1], [0, 0, 1, 1], [], []>} : vector<12x112xf32>, vector<112x48xf32>, vector<12x48xf32> -> vector<12x48xf32>
    %38 = arith.addf %33, %37 : vector<12x48xf32>
    %c0_28 = arith.constant 0 : index
    %c0_29 = arith.constant 0 : index
    %39 = vector.load %arg5[%c0_28, %c0_29] : memref<1x48xf32, #tpu.memory_space<vmem>>, vector<1x48xf32>
    %40 = vector.broadcast %39 : vector<1x48xf32> to vector<12x48xf32>
    %41 = arith.addf %38, %40 : vector<12x48xf32>
    %cst_30 = arith.constant 0.000000e+00 : f32
    %42 = vector.broadcast %cst_30 : f32 to vector<12x48xf32>
    %43 = arith.maximumf %41, %42 : vector<12x48xf32>
    %c0_31 = arith.constant 0 : index
    %c0_32 = arith.constant 0 : index
    %c0_33 = arith.constant 0 : index
    %44 = vector.load %arg6[%c0_31, %c0_32, %c0_33] : memref<1x12x48xf32, #tpu.memory_space<vmem>>, vector<1x12x48xf32>
    %45 = vector.shape_cast %44 : vector<1x12x48xf32> to vector<12x48xf32>
    %46 = vector.shape_cast %43 : vector<12x48xf32> to vector<1x12x48xf32>
    tpu.vector_store %arg6[%c0_31, %c0_32, %c0_33], %46 {strides = array<i32>} : memref<1x12x48xf32, #tpu.memory_space<vmem>>, vector<1x12x48xf32>,
    return
  }
  func.func @transform_0(%arg0: i32) -> (i32, i32, i32) {
    %c0_i32 = arith.constant 0 : i32
    %c0_i32_0 = arith.constant 0 : i32
    %c0_i32_1 = arith.constant 0 : i32
    return %arg0, %c0_i32, %c0_i32_0 : i32, i32, i32
  }
  func.func @transform_1(%arg0: i32) -> (i32, i32, i32) {
    %c0_i32 = arith.constant 0 : i32
    %c0_i32_0 = arith.constant 0 : i32
    %c0_i32_1 = arith.constant 0 : i32
    %c0_i32_2 = arith.constant 0 : i32
    return %c0_i32, %c0_i32_0, %c0_i32_1 : i32, i32, i32
  }
  func.func @transform_2(%arg0: i32) -> (i32, i32) {
    %c0_i32 = arith.constant 0 : i32
    %c0_i32_0 = arith.constant 0 : i32
    %c0_i32_1 = arith.constant 0 : i32
    return %c0_i32, %c0_i32_0 : i32, i32
  }
  func.func @transform_3(%arg0: i32) -> (i32, i32, i32) {
    %c0_i32 = arith.constant 0 : i32
    %c0_i32_0 = arith.constant 0 : i32
    %c0_i32_1 = arith.constant 0 : i32
    %c0_i32_2 = arith.constant 0 : i32
    return %c0_i32, %c0_i32_0, %c0_i32_1 : i32, i32, i32
  }
  func.func @transform_4(%arg0: i32) -> (i32, i32) {
    %c0_i32 = arith.constant 0 : i32
    %c0_i32_0 = arith.constant 0 : i32
    %c0_i32_1 = arith.constant 0 : i32
    return %c0_i32, %c0_i32_0 : i32, i32
  }
  func.func @transform_5(%arg0: i32) -> (i32, i32, i32) {
    %c0_i32 = arith.constant 0 : i32
    %c0_i32_0 = arith.constant 0 : i32
    %c0_i32_1 = arith.constant 0 : i32
    return %arg0, %c0_i32, %c0_i32_0 : i32, i32, i32
  }
}

</mosaic_0001>

<llo_original>
// kernel: encoder_forward.1
$region0: #{encoder_forward.1}
  #allocation0 [shape = 'u32[]', space=smem, size = 0x4, offset = 0x4, fixed_abs, tag = 'smem constant byte address 0x4 - core index']
  #allocation1 [shape = 'u32[144,128]{1,0:T(1,128)}', space=vmem, size = 0x12000, scoped, tag = 'internal scratch']
  %s0 = inlined_call_operand.vmem [shape: f32[2,16,48], index: 0, kind: input, shape index: {}]
  %s1 = inlined_call_operand.vmem [shape: f32[3,48,112], index: 1, kind: input, shape index: {}]
  %s2 = inlined_call_operand.vmem [shape: f32[1,112], index: 2, kind: input, shape index: {}]
  %s3 = inlined_call_operand.vmem [shape: f32[3,112,48], index: 3, kind: input, shape index: {}]
  %s4 = inlined_call_operand.vmem [shape: f32[1,48], index: 4, kind: input, shape index: {}]
  %s5 = inlined_call_operand.vmem [shape: f32[2,12,48], index: 5, kind: output, shape index: {}]
  %s6 = sld [smem:[#allocation0]]
  $region53: #{encoder_forward.1} parent=0
    _
  %s8 = ssub.s32 1, %s6
  %s9 = scalar_select 0, %s8, %s6
  loop: start=0, step=1, limit=4
  $region2: #{encoder_forward.1} parent=0 // loop_pre_header
    _
  $region3: #{encoder_forward.1} parent=0 // loop_header
    %s11 = sphi 0, %s15
    %p12 = scmp.ge.s32.totalorder %s11, 4
    %s21 = sphi 0, %s23
    %s24 = sphi 0, %s21
    %s25 = sphi 0, %s24
    %s41 = sphi 0, %s25
    %s45 = sphi 0, %s45
    %s47 = sphi 0, %s45
    %s48 = sphi 0, %s47
    %s62 = sphi 0, %s48
    %s66 = sphi 0, %s66
    %s68 = sphi 0, %s66
    %s69 = sphi 0, %s68
    %s83 = sphi 0, %s69
    %s87 = sphi 0, %s87
    %s89 = sphi 0, %s87
    %s90 = sphi 0, %s89
    %s104 = sphi 0, %s90
    %s108 = sphi 0, %s108
    %s110 = sphi 0, %s108
    %s111 = sphi 0, %s110
    %s125 = sphi 0, %s111
    %s131 = sphi 0, %s133
    %s134 = sphi 0, %s131
    %s135 = sphi 0, %s134
    %s151 = sphi 0, %s135
  $region4: #{encoder_forward.1} parent=0 // loop_header_branch
    %14 = sbr.rel (%p12) target = $region8
  $region5: #{encoder_forward.1} parent=0 // loop_body
    %s16 = ssub.s32 %s11, 1
    %s17 = ssub.s32 %s11, 2
    %s18 = sadd.s32 %s11, 1
    %s19 = ssub.s32 %s11, %s18
    %p20 = scmp.eq.s32.totalorder %s19, 0
    %s22 = sadd.s32 %s21, 1
    %s23 = scalar_select %p20, %s21, %s22
    %p26 = pneg %p20
    %p27 = scmp.eq.s32.totalorder %s11, 1
    %p28 = por %p26, %p27
    %p29 = scmp.ne.s32.totalorder %s21, %s24
    %p30 = scmp.eq.s32.totalorder %s11, 0
    %p31 = por %p29, %p30
    %p32 = scmp.ne.s32.totalorder %s21, %s24
    %p33 = scmp.eq.s32.totalorder %s16, 1
    %p34 = por %p32, %p33
    %p35 = scmp.ne.s32.totalorder %s24, %s25
    %p36 = scmp.eq.s32.totalorder %s16, 0
    %p37 = por %p35, %p36
    %p38 = scmp.ne.s32.totalorder %s24, %s25
    %p39 = scmp.eq.s32.totalorder %s17, 1
    %p40 = por %p38, %p39
    %p42 = scmp.ne.s32.totalorder %s25, %s41
    %p43 = scmp.eq.s32.totalorder %s17, 0
    %p44 = por %p42, %p43
    %s46 = sadd.s32 %s45, 1
    %p49 = scmp.eq.s32.totalorder %s11, 1
    %p50 = scmp.ne.s32.totalorder %s45, %s47
    %p51 = scmp.eq.s32.totalorder %s11, 0
    %p52 = por %p50, %p51
    %p53 = scmp.ne.s32.totalorder %s45, %s47
    %p54 = scmp.eq.s32.totalorder %s16, 1
    %p55 = por %p53, %p54
    %p56 = scmp.ne.s32.totalorder %s47, %s48
    %p57 = scmp.eq.s32.totalorder %s16, 0
    %p58 = por %p56, %p57
    %p59 = scmp.ne.s32.totalorder %s47, %s48
    %p60 = scmp.eq.s32.totalorder %s17, 1
    %p61 = por %p59, %p60
    %p63 = scmp.ne.s32.totalorder %s48, %s62
    %p64 = scmp.eq.s32.totalorder %s17, 0
    %p65 = por %p63, %p64
    %s67 = sadd.s32 %s66, 1
    %p70 = scmp.eq.s32.totalorder %s11, 1
    %p71 = scmp.ne.s32.totalorder %s66, %s68
    %p72 = scmp.eq.s32.totalorder %s11, 0
    %p73 = por %p71, %p72
    %p74 = scmp.ne.s32.totalorder %s66, %s68
    %p75 = scmp.eq.s32.totalorder %s16, 1
    %p76 = por %p74, %p75
    %p77 = scmp.ne.s32.totalorder %s68, %s69
    %p78 = scmp.eq.s32.totalorder %s16, 0
    %p79 = por %p77, %p78
    %p80 = scmp.ne.s32.totalorder %s68, %s69
    %p81 = scmp.eq.s32.totalorder %s17, 1
    %p82 = por %p80, %p81
    %p84 = scmp.ne.s32.totalorder %s69, %s83
    %p85 = scmp.eq.s32.totalorder %s17, 0
    %p86 = por %p84, %p85
    %s88 = sadd.s32 %s87, 1
    %p91 = scmp.eq.s32.totalorder %s11, 1
    %p92 = scmp.ne.s32.totalorder %s87, %s89
    %p93 = scmp.eq.s32.totalorder %s11, 0
    %p94 = por %p92, %p93
    %p95 = scmp.ne.s32.totalorder %s87, %s89
    %p96 = scmp.eq.s32.totalorder %s16, 1
    %p97 = por %p95, %p96
    %p98 = scmp.ne.s32.totalorder %s89, %s90
    %p99 = scmp.eq.s32.totalorder %s16, 0
    %p100 = por %p98, %p99
    %p101 = scmp.ne.s32.totalorder %s89, %s90
    %p102 = scmp.eq.s32.totalorder %s17, 1
    %p103 = por %p101, %p102
    %p105 = scmp.ne.s32.totalorder %s90, %s104
    %p106 = scmp.eq.s32.totalorder %s17, 0
    %p107 = por %p105, %p106
    %s109 = sadd.s32 %s108, 1
    %p112 = scmp.eq.s32.totalorder %s11, 1
    %p113 = scmp.ne.s32.totalorder %s108, %s110
    %p114 = scmp.eq.s32.totalorder %s11, 0
    %p115 = por %p113, %p114
    %p116 = scmp.ne.s32.totalorder %s108, %s110
    %p117 = scmp.eq.s32.totalorder %s16, 1
    %p118 = por %p116, %p117
    %p119 = scmp.ne.s32.totalorder %s110, %s111
    %p120 = scmp.eq.s32.totalorder %s16, 0
    %p121 = por %p119, %p120
    %p122 = scmp.ne.s32.totalorder %s110, %s111
    %p123 = scmp.eq.s32.totalorder %s17, 1
    %p124 = por %p122, %p123
    %p126 = scmp.ne.s32.totalorder %s111, %s125
    %p127 = scmp.eq.s32.totalorder %s17, 0
    %p128 = por %p126, %p127
    %s129 = ssub.s32 %s11, %s18
    %p130 = scmp.eq.s32.totalorder %s129, 0
    %s132 = sadd.s32 %s131, 1
    %s133 = scalar_select %p130, %s131, %s132
    %p136 = pneg %p130
    %p137 = scmp.eq.s32.totalorder %s11, 1
    %p138 = por %p136, %p137
    %p139 = scmp.ne.s32.totalorder %s131, %s134
    %p140 = scmp.eq.s32.totalorder %s11, 0
    %p141 = por %p139, %p140
    %p142 = scmp.ne.s32.totalorder %s131, %s134
    %p143 = scmp.eq.s32.totalorder %s16, 1
    %p144 = por %p142, %p143
    %p145 = scmp.ne.s32.totalorder %s134, %s135
    %p146 = scmp.eq.s32.totalorder %s16, 0
    %p147 = por %p145, %p146
    %p148 = scmp.ne.s32.totalorder %s134, %s135
    %p149 = scmp.eq.s32.totalorder %s17, 1
    %p150 = por %p148, %p149
    %p152 = scmp.ne.s32.totalorder %s135, %s151
    %p153 = scmp.eq.s32.totalorder %s17, 0
    %p154 = por %p152, %p153
    %p155 = scmp.le.s32.totalorder 1, %s11
    %p156 = scmp.lt.s32.totalorder %s11, 3
    %p157 = pnand %p155, %p156
    %p158 = pneg %p157
    // Predicated region
    $region9: #{encoder_forward.1} parent=5 // pred_check
      _
    $region10: #{encoder_forward.1} parent=5 // pred_check_branch
      %160 = sbr.rel (%p157) target = $region12
    $region11: #{encoder_forward.1} parent=5 // pred_region
      %s161 = ssub.s32 %s11, 1
      // Predicated region
      $region13: #{encoder_forward.1} parent=11 // pred_check
        %p162 = pneg %p58
      $region14: #{encoder_forward.1} parent=11 // pred_check_branch
        %164 = sbr.rel (%p162) target = $region16
      $region15: #{encoder_forward.1} parent=11 // pred_region
        _
      $region16: #{encoder_forward.1} parent=11 // pred_fallthru
        _
      // Predicated region
      $region17: #{encoder_forward.1} parent=11 // pred_check
        %p165 = pneg %p79
      $region18: #{encoder_forward.1} parent=11 // pred_check_branch
        %167 = sbr.rel (%p165) target = $region20
      $region19: #{encoder_forward.1} parent=11 // pred_region
        _
      $region20: #{encoder_forward.1} parent=11 // pred_fallthru
        _
      // Predicated region
      $region21: #{encoder_forward.1} parent=11 // pred_check
        %p168 = pneg %p100
      $region22: #{encoder_forward.1} parent=11 // pred_check_branch
        %170 = sbr.rel (%p168) target = $region24
      $region23: #{encoder_forward.1} parent=11 // pred_region
        _
      $region24: #{encoder_forward.1} parent=11 // pred_fallthru
        _
      // Predicated region
      $region25: #{encoder_forward.1} parent=11 // pred_check
        %p171 = pneg %p121
      $region26: #{encoder_forward.1} parent=11 // pred_check_branch
        %173 = sbr.rel (%p171) target = $region28
      $region27: #{encoder_forward.1} parent=11 // pred_region
        _
      $region28: #{encoder_forward.1} parent=11 // pred_fallthru
        _
    $region12: #{encoder_forward.1} parent=5 // pred_fallthru
      _
    %p174 = scmp.lt.s32.totalorder %s11, 2
    // Predicated region
    $region29: #{encoder_forward.1} parent=5 // pred_check
      %p175 = pneg %p174
    $region30: #{encoder_forward.1} parent=5 // pred_check_branch
      %177 = sbr.rel (%p175) target = $region32
    $region31: #{encoder_forward.1} parent=5 // pred_region
      // Predicated region
      $region33: #{encoder_forward.1} parent=31 // pred_check
        %p178 = pneg %p31
      $region34: #{encoder_forward.1} parent=31 // pred_check_branch
        %180 = sbr.rel (%p178) target = $region36
      $region35: #{encoder_forward.1} parent=31 // pred_region
        %p181 = scmp.lt.s32.totalorder %s11, 1
        %s182 = scalar_select %p181, %s11, 1
        %s183 = smul.addr %s182, 2
        %s184 = smul.addr %s183, 8
        %s185 = scalar_lea.vmem %s0, %s184
      $region36: #{encoder_forward.1} parent=31 // pred_fallthru
        _
    $region32: #{encoder_forward.1} parent=5 // pred_fallthru
      _
    %p186 = scmp.le.s32.totalorder 1, %s11
    %p187 = scmp.lt.s32.totalorder %s11, 3
    %p188 = pnand %p186, %p187
    %p189 = pneg %p188
    // Predicated region
    $region37: #{encoder_forward.1} parent=5 // pred_check
      _
    $region38: #{encoder_forward.1} parent=5 // pred_check_branch
      %191 = sbr.rel (%p188) target = $region40
    $region39: #{encoder_forward.1} parent=5 // pred_region
      %s192 = ssub.s32 %s11, 1
      %p193 = scmp.lt.s32.totalorder %s16, 1
      %s194 = scalar_select %p193, %s16, 1
      %s195 = smul.addr %s194, 2
      %s196 = smul.addr %s195, 8
      %s197 = scalar_lea.vmem %s0, %s196
      %p198 = pneg %p37
      %p199 = pneg %p34
      %p200 = pneg %p58
      %p201 = pneg %p55
      %p202 = pneg %p79
      %p203 = pneg %p76
      %p204 = pneg %p100
      %p205 = pneg %p97
      %p206 = pneg %p121
      %p207 = pneg %p118
      %p208 = pneg %p147
      %p209 = pneg %p144
      %p210 = scmp.lt.s32.totalorder %s16, 1
      %s211 = scalar_select %p210, %s16, 1
      %s212 = smul.addr %s211, 2
      %s213 = smul.addr %s212, 8
      %s214 = scalar_lea.vmem %s5, %s213
      %p215 = scmp.lt.s32.totalorder %s16, 1
      %s216 = scalar_select %p215, %s16, 1
      %s217 = smul.addr %s216, 2
      %s218 = smul.addr %s217, 8
      %s219 = scalar_lea.vmem %s0, %s218
      %p220 = scmp.lt.s32.totalorder %s16, 1
      %s221 = scalar_select %p220, %s16, 1
      %s222 = smul.addr %s221, 2
      %s223 = smul.addr %s222, 8
      %s224 = scalar_lea.vmem %s5, %s223
      %v225 = vld [vmem:[%s219] sm:$0xff]
      %v226 = vld [vmem:[%s219 + $0x8] sm:$0xff]
      %v227 = vld [vmem:[%s1] sm:$0xff]
      %v228 = vld [vmem:[%s1 + $0x8] sm:$0xff]
      %v229 = vld [vmem:[%s1 + $0x10] sm:$0xff]
      %v230 = vld [vmem:[%s1 + $0x18] sm:$0xff]
      %v231 = vld [vmem:[%s1 + $0x20] sm:$0xff]
      %v232 = vld [vmem:[%s1 + $0x28] sm:$0xff]
      %s233 = scalar_lea.vmem %s1, 48
      %v234 = vld [vmem:[%s233] sm:$0xff]
      %v235 = vld [vmem:[%s233 + $0x8] sm:$0xff]
      %v236 = vld [vmem:[%s233 + $0x10] sm:$0xff]
      %v237 = vld [vmem:[%s233 + $0x18] sm:$0xff]
      %v238 = vld [vmem:[%s233 + $0x20] sm:$0xff]
      %v239 = vld [vmem:[%s233 + $0x28] sm:$0xff]
      %vm242 = vcmask 1046528
      %v243 = vrot.slane %v225, 1
      %v244 = vrot.slane %v226, 1
      %v245 = vsel %vm242, %v243, %v244
      %vm246 = vcmask 392192
      %v247 = vsel %vm246, %v245, 0
      %v249 = vsel %vm246, %v244, 0
      %251 = vmatprep.subr.mxu0 0.0
      %252 = vmatpush1.msra.mxu0 %v234
      %253 = vmatprep.subr.mxu0 0.0
      %254 = vmatpush1.msra.mxu0 %v235
      %255 = vmatprep.subr.mxu0 0.0
      %256 = vmatpush1.msra.mxu0 %v236
      %257 = vmatprep.subr.mxu0 0.0
      %258 = vmatpush1.msra.mxu0 %v237
      %259 = vmatprep.subr.mxu0 0.0
      %260 = vmatpush1.msra.mxu0 %v238
      %261 = vmatprep.subr.mxu0 0.0
      %262 = vmatpush1.msra.mxu0 %v239
      %263 = vmatprep.subr.mxu0 0.0
      %264 = vmatpush1.msra.mxu0 0.0
      %265 = vmatprep.subr.mxu0 0.0
      %266 = vmatpush1.msra.mxu0 0.0
      %267 = vmatprep.subr.mxu0 0.0
      %268 = vmatpush1.msra.mxu0 0.0
      %269 = vmatprep.subr.mxu0 0.0
      %270 = vmatpush1.msra.mxu0 0.0
      %271 = vmatprep.subr.mxu0 0.0
      %272 = vmatpush1.msra.mxu0 0.0
      %273 = vmatprep.subr.mxu0 0.0
      %274 = vmatpush1.msra.mxu0 0.0
      %275 = vmatprep.subr.mxu0 0.0
      %276 = vmatpush1.msra.mxu0 0.0
      %277 = vmatprep.subr.mxu0 0.0
      %278 = vmatpush1.msra.mxu0 0.0
      %279 = vmatprep.subr.mxu0 0.0
      %280 = vmatpush1.msra.mxu0 0.0
      %281 = vmatprep.subr.mxu0 0.0
      %282 = vmatpush1.msra.mxu0 0.0
      %283 = vmatprep.subr.mxu0 0.0
      %284 = vmatpush1.msra.mxu0 0.0
      %285 = vmatprep.subr.mxu0 0.0
      %286 = vmatpush1.msra.mxu0 0.0
      %287 = vmatprep.subr.mxu0 0.0
      %288 = vmatpush1.msra.mxu0 0.0
      %289 = vmatprep.subr.mxu0 0.0
      %290 = vmatpush1.msra.mxu0 0.0
      %291 = vmatprep.subr.mxu0 0.0
      %292 = vmatpush1.msra.mxu0 0.0
      %293 = vmatprep.subr.mxu0 0.0
      %294 = vmatpush1.msra.mxu0 0.0
      %295 = vmatprep.subr.mxu0 0.0
      %296 = vmatpush1.msra.mxu0 0.0
      %297 = vmatprep.subr.mxu0 0.0
      %298 = vmatpush1.msra.mxu0 0.0
      %299 = vmatprep.subr.mxu0 0.0
      %300 = vmatpush1.msra.mxu0 0.0
      %301 = vmatprep.subr.mxu0 0.0
      %302 = vmatpush1.msra.mxu0 0.0
      %303 = vmatprep.subr.mxu0 0.0
      %304 = vmatpush1.msra.mxu0 0.0
      %305 = vmatprep.subr.mxu0 0.0
      %306 = vmatpush1.msra.mxu0 0.0
      %307 = vmatprep.subr.mxu0 0.0
      %308 = vmatpush1.msra.mxu0 0.0
      %309 = vmatprep.subr.mxu0 0.0
      %310 = vmatpush1.msra.mxu0 0.0
      %311 = vmatprep.subr.mxu0 0.0
      %312 = vmatpush1.msra.mxu0 0.0
      %313 = vmatprep.subr.mxu0 0.0
      %314 = vmatpush1.msra.mxu0 0.0
      %315 = vmatprep.mubr.f32.mxu0 0.0
      %316 = vmatmul.mubr.f32.gmra.mrb[0].mxu0 %v247
      %v317 = vpop.f32.mrb[0].mxu0
      %v318 = vadd.f32 0.0, %v317
      %v319 = vpop.f32.mrb[0].mxu0
      %320 = vmatprep.mubr.f32.mxu0 0.0
      %321 = vmatmul.mubr.f32.gmra.mrb[0].mxu0 %v249
      %v322 = vpop.f32.mrb[0].mxu0
      %v323 = vadd.f32 0.0, %v322
      %v324 = vpop.f32.mrb[0].mxu0
      %325 = vdwg.mxu0
      %v326 = vsel %vm246, %v225, 0
      %v328 = vsel %vm246, %v226, 0
      %330 = vmatprep.subr.mxu0 0.0
      %331 = vmatpush1.msra.mxu0 %v227
      %332 = vmatprep.subr.mxu0 0.0
      %333 = vmatpush1.msra.mxu0 %v228
      %334 = vmatprep.subr.mxu0 0.0
      %335 = vmatpush1.msra.mxu0 %v229
      %336 = vmatprep.subr.mxu0 0.0
      %337 = vmatpush1.msra.mxu0 %v230
      %338 = vmatprep.subr.mxu0 0.0
      %339 = vmatpush1.msra.mxu0 %v231
      %340 = vmatprep.subr.mxu0 0.0
      %341 = vmatpush1.msra.mxu0 %v232
      %342 = vmatprep.subr.mxu0 0.0
      %343 = vmatpush1.msra.mxu0 0.0
      %344 = vmatprep.subr.mxu0 0.0
      %345 = vmatpush1.msra.mxu0 0.0
      %346 = vmatprep.subr.mxu0 0.0
      %347 = vmatpush1.msra.mxu0 0.0
      %348 = vmatprep.subr.mxu0 0.0
      %349 = vmatpush1.msra.mxu0 0.0
      %350 = vmatprep.subr.mxu0 0.0
      %351 = vmatpush1.msra.mxu0 0.0
      %352 = vmatprep.subr.mxu0 0.0
      %353 = vmatpush1.msra.mxu0 0.0
      %354 = vmatprep.subr.mxu0 0.0
      %355 = vmatpush1.msra.mxu0 0.0
      %356 = vmatprep.subr.mxu0 0.0
      %357 = vmatpush1.msra.mxu0 0.0
      %358 = vmatprep.subr.mxu0 0.0
      %359 = vmatpush1.msra.mxu0 0.0
      %360 = vmatprep.subr.mxu0 0.0
      %361 = vmatpush1.msra.mxu0 0.0
      %362 = vmatprep.subr.mxu0 0.0
      %363 = vmatpush1.msra.mxu0 0.0
      %364 = vmatprep.subr.mxu0 0.0
      %365 = vmatpush1.msra.mxu0 0.0
      %366 = vmatprep.subr.mxu0 0.0
      %367 = vmatpush1.msra.mxu0 0.0
      %368 = vmatprep.subr.mxu0 0.0
      %369 = vmatpush1.msra.mxu0 0.0
      %370 = vmatprep.subr.mxu0 0.0
      %371 = vmatpush1.msra.mxu0 0.0
      %372 = vmatprep.subr.mxu0 0.0
      %373 = vmatpush1.msra.mxu0 0.0
      %374 = vmatprep.subr.mxu0 0.0
      %375 = vmatpush1.msra.mxu0 0.0
      %376 = vmatprep.subr.mxu0 0.0
      %377 = vmatpush1.msra.mxu0 0.0
      %378 = vmatprep.subr.mxu0 0.0
      %379 = vmatpush1.msra.mxu0 0.0
      %380 = vmatprep.subr.mxu0 0.0
      %381 = vmatpush1.msra.mxu0 0.0
      %382 = vmatprep.subr.mxu0 0.0
      %383 = vmatpush1.msra.mxu0 0.0
      %384 = vmatprep.subr.mxu0 0.0
      %385 = vmatpush1.msra.mxu0 0.0
      %386 = vmatprep.subr.mxu0 0.0
      %387 = vmatpush1.msra.mxu0 0.0
      %388 = vmatprep.subr.mxu0 0.0
      %389 = vmatpush1.msra.mxu0 0.0
      %390 = vmatprep.subr.mxu0 0.0
      %391 = vmatpush1.msra.mxu0 0.0
      %392 = vmatprep.subr.mxu0 0.0
      %393 = vmatpush1.msra.mxu0 0.0
      %394 = vmatprep.mubr.f32.mxu0 0.0
      %395 = vmatmul.mubr.f32.gmra.mrb[0].mxu0 %v326
      %v396 = vpop.f32.mrb[0].mxu0
      %v397 = vadd.f32 %v318, %v396
      %v398 = vpop.f32.mrb[0].mxu0
      %399 = vmatprep.mubr.f32.mxu0 0.0
      %400 = vmatmul.mubr.f32.gmra.mrb[0].mxu0 %v328
      %v401 = vpop.f32.mrb[0].mxu0
      %v402 = vadd.f32 %v323, %v401
      %v403 = vpop.f32.mrb[0].mxu0
      %404 = vdwg.mxu0
      %s405 = scalar_lea.vmem %s1, 96
      %v406 = vld [vmem:[%s405] sm:$0xff]
      %v407 = vld [vmem:[%s405 + $0x8] sm:$0xff]
      %v408 = vld [vmem:[%s405 + $0x10] sm:$0xff]
      %v409 = vld [vmem:[%s405 + $0x18] sm:$0xff]
      %v410 = vld [vmem:[%s405 + $0x20] sm:$0xff]
      %v411 = vld [vmem:[%s405 + $0x28] sm:$0xff]
      %vm412 = vcmask 1045504
      %v413 = vrot.slane %v225, 2
      %v414 = vrot.slane %v226, 2
      %v415 = vsel %vm412, %v413, %v414
      %v416 = vsel %vm246, %v415, 0
      %v418 = vsel %vm246, %v414, 0
      %420 = vmatprep.subr.mxu0 0.0
      %421 = vmatpush1.msra.mxu0 %v406
      %422 = vmatprep.subr.mxu0 0.0
      %423 = vmatpush1.msra.mxu0 %v407
      %424 = vmatprep.subr.mxu0 0.0
      %425 = vmatpush1.msra.mxu0 %v408
      %426 = vmatprep.subr.mxu0 0.0
      %427 = vmatpush1.msra.mxu0 %v409
      %428 = vmatprep.subr.mxu0 0.0
      %429 = vmatpush1.msra.mxu0 %v410
      %430 = vmatprep.subr.mxu0 0.0
      %431 = vmatpush1.msra.mxu0 %v411
      %432 = vmatprep.subr.mxu0 0.0
      %433 = vmatpush1.msra.mxu0 0.0
      %434 = vmatprep.subr.mxu0 0.0
      %435 = vmatpush1.msra.mxu0 0.0
      %436 = vmatprep.subr.mxu0 0.0
      %437 = vmatpush1.msra.mxu0 0.0
      %438 = vmatprep.subr.mxu0 0.0
      %439 = vmatpush1.msra.mxu0 0.0
      %440 = vmatprep.subr.mxu0 0.0
      %441 = vmatpush1.msra.mxu0 0.0
      %442 = vmatprep.subr.mxu0 0.0
      %443 = vmatpush1.msra.mxu0 0.0
      %444 = vmatprep.subr.mxu0 0.0
      %445 = vmatpush1.msra.mxu0 0.0
      %446 = vmatprep.subr.mxu0 0.0
      %447 = vmatpush1.msra.mxu0 0.0
      %448 = vmatprep.subr.mxu0 0.0
      %449 = vmatpush1.msra.mxu0 0.0
      %450 = vmatprep.subr.mxu0 0.0
      %451 = vmatpush1.msra.mxu0 0.0
      %452 = vmatprep.subr.mxu0 0.0
      %453 = vmatpush1.msra.mxu0 0.0
      %454 = vmatprep.subr.mxu0 0.0
      %455 = vmatpush1.msra.mxu0 0.0
      %456 = vmatprep.subr.mxu0 0.0
      %457 = vmatpush1.msra.mxu0 0.0
      %458 = vmatprep.subr.mxu0 0.0
      %459 = vmatpush1.msra.mxu0 0.0
      %460 = vmatprep.subr.mxu0 0.0
      %461 = vmatpush1.msra.mxu0 0.0
      %462 = vmatprep.subr.mxu0 0.0
      %463 = vmatpush1.msra.mxu0 0.0
      %464 = vmatprep.subr.mxu0 0.0
      %465 = vmatpush1.msra.mxu0 0.0
      %466 = vmatprep.subr.mxu0 0.0
      %467 = vmatpush1.msra.mxu0 0.0
      %468 = vmatprep.subr.mxu0 0.0
      %469 = vmatpush1.msra.mxu0 0.0
      %470 = vmatprep.subr.mxu0 0.0
      %471 = vmatpush1.msra.mxu0 0.0
      %472 = vmatprep.subr.mxu0 0.0
      %473 = vmatpush1.msra.mxu0 0.0
      %474 = vmatprep.subr.mxu0 0.0
      %475 = vmatpush1.msra.mxu0 0.0
      %476 = vmatprep.subr.mxu0 0.0
      %477 = vmatpush1.msra.mxu0 0.0
      %478 = vmatprep.subr.mxu0 0.0
      %479 = vmatpush1.msra.mxu0 0.0
      %480 = vmatprep.subr.mxu0 0.0
      %481 = vmatpush1.msra.mxu0 0.0
      %482 = vmatprep.subr.mxu0 0.0
      %483 = vmatpush1.msra.mxu0 0.0
      %484 = vmatprep.mubr.f32.mxu0 0.0
      %485 = vmatmul.mubr.f32.gmra.mrb[0].mxu0 %v416
      %v486 = vpop.f32.mrb[0].mxu0
      %v487 = vadd.f32 0.0, %v486
      %v488 = vpop.f32.mrb[0].mxu0
      %489 = vmatprep.mubr.f32.mxu0 0.0
      %490 = vmatmul.mubr.f32.gmra.mrb[0].mxu0 %v418
      %v491 = vpop.f32.mrb[0].mxu0
      %v492 = vadd.f32 0.0, %v491
      %v493 = vpop.f32.mrb[0].mxu0
      %494 = vdwg.mxu0
      %v495 = vadd.f32 %v397, %v487
      %v496 = vadd.f32 %v402, %v492
      %v497 = vld [vmem:[%s2] sm:$0x1]
      %v499 = vlaneseq
      %v500 = vshrl.u32 %v499, 7
      %v501 = vsub.s32 0, %v500
      %v502 = vrot.slane %v497, %v501
      %v504 = vadd.f32 %v495, %v502
      %v505 = vadd.f32 %v496, %v502
      %v506 = vmax.f32 %v504, 0.0
      %v507 = vmax.f32 %v505, 0.0
      %v508 = vld [vmem:[%s3] sm:$0xff]
      %v509 = vld [vmem:[%s3 + $0x8] sm:$0xff]
      %v510 = vld [vmem:[%s3 + $0x10] sm:$0xff]
      %v511 = vld [vmem:[%s3 + $0x18] sm:$0xff]
      %v512 = vld [vmem:[%s3 + $0x20] sm:$0xff]
      %v513 = vld [vmem:[%s3 + $0x28] sm:$0xff]
      %v514 = vld [vmem:[%s3 + $0x30] sm:$0xff]
      %v515 = vld [vmem:[%s3 + $0x38] sm:$0xff]
      %v516 = vld [vmem:[%s3 + $0x40] sm:$0xff]
      %v517 = vld [vmem:[%s3 + $0x48] sm:$0xff]
      %v518 = vld [vmem:[%s3 + $0x50] sm:$0xff]
      %v519 = vld [vmem:[%s3 + $0x58] sm:$0xff]
      %v520 = vld [vmem:[%s3 + $0x60] sm:$0xff]
      %v521 = vld [vmem:[%s3 + $0x68] sm:$0xff]
      %s522 = scalar_lea.vmem %s3, 112
      %v523 = vld [vmem:[%s522] sm:$0xff]
      %v524 = vld [vmem:[%s522 + $0x8] sm:$0xff]
      %v525 = vld [vmem:[%s522 + $0x10] sm:$0xff]
      %v526 = vld [vmem:[%s522 + $0x18] sm:$0xff]
      %v527 = vld [vmem:[%s522 + $0x20] sm:$0xff]
      %v528 = vld [vmem:[%s522 + $0x28] sm:$0xff]
      %v529 = vld [vmem:[%s522 + $0x30] sm:$0xff]
      %v530 = vld [vmem:[%s522 + $0x38] sm:$0xff]
      %v531 = vld [vmem:[%s522 + $0x40] sm:$0xff]
      %v532 = vld [vmem:[%s522 + $0x48] sm:$0xff]
      %v533 = vld [vmem:[%s522 + $0x50] sm:$0xff]
      %v534 = vld [vmem:[%s522 + $0x58] sm:$0xff]
      %v535 = vld [vmem:[%s522 + $0x60] sm:$0xff]
      %v536 = vld [vmem:[%s522 + $0x68] sm:$0xff]
      %v539 = vrot.slane %v506, 1
      %v540 = vrot.slane %v507, 1
      %v541 = vsel %vm242, %v539, %v540
      %vm542 = vcmask 916480
      %v543 = vsel %vm542, %v541, 0
      %v545 = vsel %vm542, %v540, 0
      %547 = vmatprep.subr.mxu0 0.0
      %548 = vmatpush1.msra.mxu0 %v523
      %549 = vmatprep.subr.mxu0 0.0
      %550 = vmatpush1.msra.mxu0 %v524
      %551 = vmatprep.subr.mxu0 0.0
      %552 = vmatpush1.msra.mxu0 %v525
      %553 = vmatprep.subr.mxu0 0.0
      %554 = vmatpush1.msra.mxu0 %v526
      %555 = vmatprep.subr.mxu0 0.0
      %556 = vmatpush1.msra.mxu0 %v527
      %557 = vmatprep.subr.mxu0 0.0
      %558 = vmatpush1.msra.mxu0 %v528
      %559 = vmatprep.subr.mxu0 0.0
      %560 = vmatpush1.msra.mxu0 %v529
      %561 = vmatprep.subr.mxu0 0.0
      %562 = vmatpush1.msra.mxu0 %v530
      %563 = vmatprep.subr.mxu0 0.0
      %564 = vmatpush1.msra.mxu0 %v531
      %565 = vmatprep.subr.mxu0 0.0
      %566 = vmatpush1.msra.mxu0 %v532
      %567 = vmatprep.subr.mxu0 0.0
      %568 = vmatpush1.msra.mxu0 %v533
      %569 = vmatprep.subr.mxu0 0.0
      %570 = vmatpush1.msra.mxu0 %v534
      %571 = vmatprep.subr.mxu0 0.0
      %572 = vmatpush1.msra.mxu0 %v535
      %573 = vmatprep.subr.mxu0 0.0
      %574 = vmatpush1.msra.mxu0 %v536
      %575 = vmatprep.subr.mxu0 0.0
      %576 = vmatpush1.msra.mxu0 0.0
      %577 = vmatprep.subr.mxu0 0.0
      %578 = vmatpush1.msra.mxu0 0.0
      %579 = vmatprep.subr.mxu0 0.0
      %580 = vmatpush1.msra.mxu0 0.0
      %581 = vmatprep.subr.mxu0 0.0
      %582 = vmatpush1.msra.mxu0 0.0
      %583 = vmatprep.subr.mxu0 0.0
      %584 = vmatpush1.msra.mxu0 0.0
      %585 = vmatprep.subr.mxu0 0.0
      %586 = vmatpush1.msra.mxu0 0.0
      %587 = vmatprep.subr.mxu0 0.0
      %588 = vmatpush1.msra.mxu0 0.0
      %589 = vmatprep.subr.mxu0 0.0
      %590 = vmatpush1.msra.mxu0 0.0
      %591 = vmatprep.subr.mxu0 0.0
      %592 = vmatpush1.msra.mxu0 0.0
      %593 = vmatprep.subr.mxu0 0.0
      %594 = vmatpush1.msra.mxu0 0.0
      %595 = vmatprep.subr.mxu0 0.0
      %596 = vmatpush1.msra.mxu0 0.0
      %597 = vmatprep.subr.mxu0 0.0
      %598 = vmatpush1.msra.mxu0 0.0
      %599 = vmatprep.subr.mxu0 0.0
      %600 = vmatpush1.msra.mxu0 0.0
      %601 = vmatprep.subr.mxu0 0.0
      %602 = vmatpush1.msra.mxu0 0.0
      %603 = vmatprep.subr.mxu0 0.0
      %604 = vmatpush1.msra.mxu0 0.0
      %605 = vmatprep.subr.mxu0 0.0
      %606 = vmatpush1.msra.mxu0 0.0
      %607 = vmatprep.subr.mxu0 0.0
      %608 = vmatpush1.msra.mxu0 0.0
      %609 = vmatprep.subr.mxu0 0.0
      %610 = vmatpush1.msra.mxu0 0.0
      %611 = vmatprep.mubr.f32.mxu0 0.0
      %612 = vmatmul.mubr.f32.gmra.mrb[0].mxu0 %v543
      %v613 = vpop.f32.mrb[0].mxu0
      %v614 = vadd.f32 0.0, %v613
      %v615 = vpop.f32.mrb[0].mxu0
      %616 = vmatprep.mubr.f32.mxu0 0.0
      %617 = vmatmul.mubr.f32.gmra.mrb[0].mxu0 %v545
      %v618 = vpop.f32.mrb[0].mxu0
      %v619 = vadd.f32 0.0, %v618
      %v620 = vpop.f32.mrb[0].mxu0
      %621 = vdwg.mxu0
      %v622 = vsel %vm542, %v506, 0
      %v624 = vsel %vm542, %v507, 0
      %626 = vmatprep.subr.mxu0 0.0
      %627 = vmatpush1.msra.mxu0 %v508
      %628 = vmatprep.subr.mxu0 0.0
      %629 = vmatpush1.msra.mxu0 %v509
      %630 = vmatprep.subr.mxu0 0.0
      %631 = vmatpush1.msra.mxu0 %v510
      %632 = vmatprep.subr.mxu0 0.0
      %633 = vmatpush1.msra.mxu0 %v511
      %634 = vmatprep.subr.mxu0 0.0
      %635 = vmatpush1.msra.mxu0 %v512
      %636 = vmatprep.subr.mxu0 0.0
      %637 = vmatpush1.msra.mxu0 %v513
      %638 = vmatprep.subr.mxu0 0.0
      %639 = vmatpush1.msra.mxu0 %v514
      %640 = vmatprep.subr.mxu0 0.0
      %641 = vmatpush1.msra.mxu0 %v515
      %642 = vmatprep.subr.mxu0 0.0
      %643 = vmatpush1.msra.mxu0 %v516
      %644 = vmatprep.subr.mxu0 0.0
      %645 = vmatpush1.msra.mxu0 %v517
      %646 = vmatprep.subr.mxu0 0.0
      %647 = vmatpush1.msra.mxu0 %v518
      %648 = vmatprep.subr.mxu0 0.0
      %649 = vmatpush1.msra.mxu0 %v519
      %650 = vmatprep.subr.mxu0 0.0
      %651 = vmatpush1.msra.mxu0 %v520
      %652 = vmatprep.subr.mxu0 0.0
      %653 = vmatpush1.msra.mxu0 %v521
      %654 = vmatprep.subr.mxu0 0.0
      %655 = vmatpush1.msra.mxu0 0.0
      %656 = vmatprep.subr.mxu0 0.0
      %657 = vmatpush1.msra.mxu0 0.0
      %658 = vmatprep.subr.mxu0 0.0
      %659 = vmatpush1.msra.mxu0 0.0
      %660 = vmatprep.subr.mxu0 0.0
      %661 = vmatpush1.msra.mxu0 0.0
      %662 = vmatprep.subr.mxu0 0.0
      %663 = vmatpush1.msra.mxu0 0.0
      %664 = vmatprep.subr.mxu0 0.0
      %665 = vmatpush1.msra.mxu0 0.0
      %666 = vmatprep.subr.mxu0 0.0
      %667 = vmatpush1.msra.mxu0 0.0
      %668 = vmatprep.subr.mxu0 0.0
      %669 = vmatpush1.msra.mxu0 0.0
      %670 = vmatprep.subr.mxu0 0.0
      %671 = vmatpush1.msra.mxu0 0.0
      %672 = vmatprep.subr.mxu0 0.0
      %673 = vmatpush1.msra.mxu0 0.0
      %674 = vmatprep.subr.mxu0 0.0
      %675 = vmatpush1.msra.mxu0 0.0
      %676 = vmatprep.subr.mxu0 0.0
      %677 = vmatpush1.msra.mxu0 0.0
      %678 = vmatprep.subr.mxu0 0.0
      %679 = vmatpush1.msra.mxu0 0.0
      %680 = vmatprep.subr.mxu0 0.0
      %681 = vmatpush1.msra.mxu0 0.0
      %682 = vmatprep.subr.mxu0 0.0
      %683 = vmatpush1.msra.mxu0 0.0
      %684 = vmatprep.subr.mxu0 0.0
      %685 = vmatpush1.msra.mxu0 0.0
      %686 = vmatprep.subr.mxu0 0.0
      %687 = vmatpush1.msra.mxu0 0.0
      %688 = vmatprep.subr.mxu0 0.0
      %689 = vmatpush1.msra.mxu0 0.0
      %690 = vmatprep.mubr.f32.mxu0 0.0
      %691 = vmatmul.mubr.f32.gmra.mrb[0].mxu0 %v622
      %v692 = vpop.f32.mrb[0].mxu0
      %v693 = vadd.f32 %v614, %v692
      %v694 = vpop.f32.mrb[0].mxu0
      %695 = vmatprep.mubr.f32.mxu0 0.0
      %696 = vmatmul.mubr.f32.gmra.mrb[0].mxu0 %v624
      %v697 = vpop.f32.mrb[0].mxu0
      %v698 = vadd.f32 %v619, %v697
      %v699 = vpop.f32.mrb[0].mxu0
      %700 = vdwg.mxu0
      %s701 = scalar_lea.vmem %s3, 224
      %v702 = vld [vmem:[%s701] sm:$0xff]
      %v703 = vld [vmem:[%s701 + $0x8] sm:$0xff]
      %v704 = vld [vmem:[%s701 + $0x10] sm:$0xff]
      %v705 = vld [vmem:[%s701 + $0x18] sm:$0xff]
      %v706 = vld [vmem:[%s701 + $0x20] sm:$0xff]
      %v707 = vld [vmem:[%s701 + $0x28] sm:$0xff]
      %v708 = vld [vmem:[%s701 + $0x30] sm:$0xff]
      %v709 = vld [vmem:[%s701 + $0x38] sm:$0xff]
      %v710 = vld [vmem:[%s701 + $0x40] sm:$0xff]
      %v711 = vld [vmem:[%s701 + $0x48] sm:$0xff]
      %v712 = vld [vmem:[%s701 + $0x50] sm:$0xff]
      %v713 = vld [vmem:[%s701 + $0x58] sm:$0xff]
      %v714 = vld [vmem:[%s701 + $0x60] sm:$0xff]
      %v715 = vld [vmem:[%s701 + $0x68] sm:$0xff]
      %v716 = vrot.slane %v506, 2
      %v717 = vrot.slane %v507, 2
      %v718 = vsel %vm412, %v716, %v717
      %v719 = vsel %vm542, %v718, 0
      %v721 = vsel %vm542, %v717, 0
      %723 = vmatprep.subr.mxu0 0.0
      %724 = vmatpush1.msra.mxu0 %v702
      %725 = vmatprep.subr.mxu0 0.0
      %726 = vmatpush1.msra.mxu0 %v703
      %727 = vmatprep.subr.mxu0 0.0
      %728 = vmatpush1.msra.mxu0 %v704
      %729 = vmatprep.subr.mxu0 0.0
      %730 = vmatpush1.msra.mxu0 %v705
      %731 = vmatprep.subr.mxu0 0.0
      %732 = vmatpush1.msra.mxu0 %v706
      %733 = vmatprep.subr.mxu0 0.0
      %734 = vmatpush1.msra.mxu0 %v707
      %735 = vmatprep.subr.mxu0 0.0
      %736 = vmatpush1.msra.mxu0 %v708
      %737 = vmatprep.subr.mxu0 0.0
      %738 = vmatpush1.msra.mxu0 %v709
      %739 = vmatprep.subr.mxu0 0.0
      %740 = vmatpush1.msra.mxu0 %v710
      %741 = vmatprep.subr.mxu0 0.0
      %742 = vmatpush1.msra.mxu0 %v711
      %743 = vmatprep.subr.mxu0 0.0
      %744 = vmatpush1.msra.mxu0 %v712
      %745 = vmatprep.subr.mxu0 0.0
      %746 = vmatpush1.msra.mxu0 %v713
      %747 = vmatprep.subr.mxu0 0.0
      %748 = vmatpush1.msra.mxu0 %v714
      %749 = vmatprep.subr.mxu0 0.0
      %750 = vmatpush1.msra.mxu0 %v715
      %751 = vmatprep.subr.mxu0 0.0
      %752 = vmatpush1.msra.mxu0 0.0
      %753 = vmatprep.subr.mxu0 0.0
      %754 = vmatpush1.msra.mxu0 0.0
      %755 = vmatprep.subr.mxu0 0.0
      %756 = vmatpush1.msra.mxu0 0.0
      %757 = vmatprep.subr.mxu0 0.0
      %758 = vmatpush1.msra.mxu0 0.0
      %759 = vmatprep.subr.mxu0 0.0
      %760 = vmatpush1.msra.mxu0 0.0
      %761 = vmatprep.subr.mxu0 0.0
      %762 = vmatpush1.msra.mxu0 0.0
      %763 = vmatprep.subr.mxu0 0.0
      %764 = vmatpush1.msra.mxu0 0.0
      %765 = vmatprep.subr.mxu0 0.0
      %766 = vmatpush1.msra.mxu0 0.0
      %767 = vmatprep.subr.mxu0 0.0
      %768 = vmatpush1.msra.mxu0 0.0
      %769 = vmatprep.subr.mxu0 0.0
      %770 = vmatpush1.msra.mxu0 0.0
      %771 = vmatprep.subr.mxu0 0.0
      %772 = vmatpush1.msra.mxu0 0.0
      %773 = vmatprep.subr.mxu0 0.0
      %774 = vmatpush1.msra.mxu0 0.0
      %775 = vmatprep.subr.mxu0 0.0
      %776 = vmatpush1.msra.mxu0 0.0
      %777 = vmatprep.subr.mxu0 0.0
      %778 = vmatpush1.msra.mxu0 0.0
      %779 = vmatprep.subr.mxu0 0.0
      %780 = vmatpush1.msra.mxu0 0.0
      %781 = vmatprep.subr.mxu0 0.0
      %782 = vmatpush1.msra.mxu0 0.0
      %783 = vmatprep.subr.mxu0 0.0
      %784 = vmatpush1.msra.mxu0 0.0
      %785 = vmatprep.subr.mxu0 0.0
      %786 = vmatpush1.msra.mxu0 0.0
      %787 = vmatprep.mubr.f32.mxu0 0.0
      %788 = vmatmul.mubr.f32.gmra.mrb[0].mxu0 %v719
      %v789 = vpop.f32.mrb[0].mxu0
      %v790 = vadd.f32 0.0, %v789
      %v791 = vpop.f32.mrb[0].mxu0
      %792 = vmatprep.mubr.f32.mxu0 0.0
      %793 = vmatmul.mubr.f32.gmra.mrb[0].mxu0 %v721
      %v794 = vpop.f32.mrb[0].mxu0
      %v795 = vadd.f32 0.0, %v794
      %v796 = vpop.f32.mrb[0].mxu0
      %797 = vdwg.mxu0
      %v798 = vadd.f32 %v693, %v790
      %v799 = vadd.f32 %v698, %v795
      %v800 = vld [vmem:[%s4] sm:$0x1]
      %v802 = vlaneseq
      %v803 = vshrl.u32 %v802, 7
      %v804 = vsub.s32 0, %v803
      %v805 = vrot.slane %v800, %v804
      %v807 = vadd.f32 %v798, %v805
      %v808 = vadd.f32 %v799, %v805
      %v809 = vmax.f32 %v807, 0.0
      %v810 = vmax.f32 %v808, 0.0
      %811 = vst.msk [vmem:[%s224] sm:$0xff] %vm246, %v809
      %vm812 = vcmask 388096
      %813 = vst.msk [vmem:[%s224 + $0x8] sm:$0xf] %vm812, %v810
      %p814 = scmp.lt.s32.totalorder %s16, 1
      %s815 = scalar_select %p814, %s16, 1
      %s816 = smul.addr %s815, 2
      %s817 = smul.addr %s816, 8
      %s818 = scalar_lea.vmem %s5, %s817
      // Predicated region
      $region41: #{encoder_forward.1} parent=39 // pred_check
        %p819 = pneg %p144
      $region42: #{encoder_forward.1} parent=39 // pred_check_branch
        %821 = sbr.rel (%p819) target = $region44
      $region43: #{encoder_forward.1} parent=39 // pred_region
        _
      $region44: #{encoder_forward.1} parent=39 // pred_fallthru
        _
    $region40: #{encoder_forward.1} parent=5 // pred_fallthru
      _
    %p822 = scmp.le.s32.totalorder 2, %s11
    // Predicated region
    $region45: #{encoder_forward.1} parent=5 // pred_check
      %p823 = pneg %p822
    $region46: #{encoder_forward.1} parent=5 // pred_check_branch
      %825 = sbr.rel (%p823) target = $region48
    $region47: #{encoder_forward.1} parent=5 // pred_region
      %s826 = ssub.s32 %s11, 2
      // Predicated region
      $region49: #{encoder_forward.1} parent=47 // pred_check
        %p827 = pneg %p150
      $region50: #{encoder_forward.1} parent=47 // pred_check_branch
        %829 = sbr.rel (%p827) target = $region52
      $region51: #{encoder_forward.1} parent=47 // pred_region
        %p830 = scmp.lt.s32.totalorder %s17, 1
        %s831 = scalar_select %p830, %s17, 1
        %s832 = smul.addr %s831, 2
        %s833 = smul.addr %s832, 8
        %s834 = scalar_lea.vmem %s5, %s833
      $region52: #{encoder_forward.1} parent=47 // pred_fallthru
        _
    $region48: #{encoder_forward.1} parent=5 // pred_fallthru
      _
  $region6: #{encoder_forward.1} parent=0 // loop_footer
    %s15 = sadd.s32 1, %s11
  $region7: #{encoder_forward.1} parent=0 // loop_footer_branch
    %10 = sbr.rel target = $region3
  $region8: #{encoder_forward.1} parent=0 // loop_exit
    _

</llo_original>
